<compile_context>
chip_gen: v6e
topology: v6e:2x2x1
jax: 0.10.0
libtpu: 0.0.40
codegen_flags: <defaults>
</compile_context>

<pallas_src>
import functools

import jax
import jax.numpy as jnp
from jax.experimental import pallas as pl
from jax.experimental.pallas import tpu as pltpu


def _round_up(x, m):
    return (x + m - 1) // m * m


def _layout(F, W, P, D):
    """Row layout of the packed parameter slab.

    Branch segments: weight rows at r0 (8-aligned), bias row at the 8-aligned
    offset r0 + round_up(in_dim, 8). The trunk segment is stored TRANSPOSED,
    [P+1, D+1], with its bias folded in as the last column (no bias row).
    Returns (branch_segs, trunk_row0, total_rows) with
    branch_segs = ((weight_row0, in_dim, out_dim, bias_row), ...).
    """
    Pp = P + 1
    branch_dims = [(F, W), (W, W), (W, W), (W, W), (W, Pp)]
    segs = []
    r = 0
    for in_dim, out_dim in branch_dims:
        w_rows = _round_up(in_dim, 8)
        segs.append((r, in_dim, out_dim, r + w_rows))
        r += w_rows + 8
    trunk_r0 = r
    r += _round_up(Pp, 8)
    return tuple(segs), trunk_r0, r


def pack_params(params, F, W, P, D):
    """Pack all weights/biases into one [total_rows, cols] f32 slab (run ONCE)."""
    segs, trunk_r0, total_rows = _layout(F, W, P, D)
    Pp, Dp = P + 1, D + 1
    cols = _round_up(max(W, Pp, Dp), 128)

    # Layer 5 augmented with a zero weight column and bias 1 -> out_b carries
    # a trailing ones column, which folds the trunk-means bias into the final
    # combination dot.
    w5a = jnp.concatenate(
        [params["w5"], jnp.zeros((W, 1), params["w5"].dtype)], axis=1)
    b5a = jnp.concatenate(
        [params["b5"], jnp.ones((1, 1), params["b5"].dtype)], axis=1)

    mats = [(params["w1"], params["b1"]), (params["w2"], params["b2"]),
            (params["w3"], params["b3"]), (params["w4"], params["b4"]),
            (w5a, b5a)]

    slab = jnp.zeros((total_rows, cols), jnp.float32)
    for (r0, in_dim, out_dim, brow), (w, b) in zip(segs, mats):
        slab = slab.at[r0:r0 + in_dim, 0:out_dim].set(w.astype(jnp.float32))
        slab = slab.at[brow, 0:out_dim].set(b.astype(jnp.float32)[0])

    # Fused trunk block, TRANSPOSED: rows = [components | means] = P+1,
    # cols = [weights over D | bias] = D+1.
    twa = jnp.concatenate([params["tcw"], params["tmw"]], axis=1)      # [D, Pp]
    tba = jnp.concatenate([params["tcb"], params["tmb"]], axis=1)      # [1, Pp]
    trunk_t = jnp.concatenate([twa, tba], axis=0).T.astype(jnp.float32)  # [Pp, Dp]
    slab = slab.at[trunk_r0:trunk_r0 + Pp, 0:Dp].set(trunk_t)
    return slab


def pod_deeponet_kernel(noise_ref, coords_ref, slab_ref, out_ref, *,
                        segs, trunk_r0, Pp, Dp):
    """noise [Bp,F], coords^T+ones [Dp,TN], slab [R,C] -> out tile [Bp,TN]."""
    x = noise_ref[...]                                            # [Bp, F]
    n_layers = len(segs)

    # ---- branch MLP: 5 matmuls + 4 tanh (MXU + EUP), biases from slab ------
    for li, (r0, in_dim, out_dim, brow) in enumerate(segs):
        w = slab_ref[r0:r0 + in_dim, 0:out_dim]                   # static, 8-aligned
        b = slab_ref[brow:brow + 1, 0:out_dim]
        x = jnp.dot(x, w, preferred_element_type=jnp.float32) + b
        if li < n_layers - 1:
            x = jnp.tanh(x)
    out_b = x                                                     # [Bp, Pp], last col == 1

    # ---- fused trunk (pre-transposed): [Pp,Dp] @ [Dp,TN] -> out_t^T --------
    tw = slab_ref[trunk_r0:trunk_r0 + Pp, 0:Dp]                   # [Pp, Dp]
    out_t_t = jnp.dot(tw, coords_ref[...],
                      preferred_element_type=jnp.float32)         # [Pp, TN]

    # ---- combination: plain MXU dot; folded bias rides on the ones column --
    out_ref[...] = jnp.dot(out_b, out_t_t,
                           preferred_element_type=jnp.float32)    # [Bp, TN]


def _forward(noise, coords, slab, *, segs, trunk_r0, F, W, P, D, tile_n):
    """Padding + tiled pallas_call + un-pad. Traced under jax.jit."""
    B = noise.shape[0]
    N = coords.shape[0]
    Pp, Dp = P + 1, D + 1

    Bp = _round_up(max(B, 1), 8)
    TN = min(_round_up(tile_n, 128), _round_up(max(N, 1), 128))
    Np = _round_up(max(N, 1), TN)
    grid_n = Np // TN

    noise_p = jnp.pad(noise.astype(jnp.float32), ((0, Bp - B), (0, 0)))   # [Bp, F]
    # coords augmented with a ones row (activates the folded trunk bias),
    # zero-padded to Np rows, then transposed -> lane-dense [Dp, Np].
    coords_aug = jnp.concatenate(
        [coords.astype(jnp.float32), jnp.ones((N, 1), jnp.float32)], axis=1)
    coords_t = jnp.pad(coords_aug, ((0, Np - N), (0, 0))).T               # [Dp, Np]

    R, C = slab.shape
    kernel = functools.partial(pod_deeponet_kernel, segs=segs,
                               trunk_r0=trunk_r0, Pp=Pp, Dp=Dp)

    flops = 2 * grid_n * (Bp * F * W + 3 * Bp * W * W + Bp * W * Pp
                          + Pp * Dp * TN + Bp * Pp * TN)
    bytes_accessed = 4 * (Bp * F + Dp * Np + R * C * grid_n + Bp * Np)
    vmem_bytes = 4 * (2 * (Bp * F + Dp * TN + R * C + Bp * TN)
                      + 4 * Bp * W + Pp * TN)
    vmem_bytes = int(min(64 << 20, max(8 << 20, 3 * vmem_bytes)))

    out = pl.pallas_call(
        kernel,
        out_shape=jax.ShapeDtypeStruct((Bp, Np), jnp.float32),
        grid_spec=pltpu.PrefetchScalarGridSpec(
            num_scalar_prefetch=0,
            grid=(grid_n,),
            in_specs=[
                pl.BlockSpec((Bp, F), lambda i: (0, 0)),    # noise: resident
                pl.BlockSpec((Dp, TN), lambda i: (0, i)),   # coords^T: tiled over N
                pl.BlockSpec((R, C), lambda i: (0, 0)),     # packed params: resident
            ],
            out_specs=pl.BlockSpec((Bp, TN), lambda i: (0, i)),
        ),
        compiler_params=pltpu.CompilerParams(
            dimension_semantics=("parallel",),              # 2x on v7x, no-op v5e/v6e
            vmem_limit_bytes=vmem_bytes),
        cost_estimate=pl.CostEstimate(
            flops=int(flops),
            transcendentals=int(4 * Bp * W * grid_n),
            bytes_accessed=int(bytes_accessed)),
    )(noise_p, coords_t, slab)

    # Slice off padding BEFORE flattening so repeat_interleave ordering
    # (row b slowest) is preserved.
    return out[:B, :N].reshape(B * N)


def make_pod_deeponet(params, *, tile_n=2048):
    """Pack the parameter slab ONCE and return a jitted apply(noise, coords)."""
    F, W = params["w1"].shape
    P = params["w5"].shape[1]
    D = params["tcw"].shape[0]
    segs, trunk_r0, _ = _layout(F, W, P, D)
    slab = pack_params(params, F, W, P, D)          # one-time packing

    fwd = jax.jit(functools.partial(_forward, segs=segs, trunk_r0=trunk_r0,
                                    F=F, W=W, P=P, D=D, tile_n=tile_n))

    def apply(noise, coordinates):
        return fwd(noise, coordinates, slab)

    return apply


def init_params(key, noise_feature, p, coord_dim, width=32):
    ks = jax.random.split(key, 16)

    def lin(kw, kb, fan_in, fan_out):
        bound = 1.0 / jnp.sqrt(fan_in)
        w = jax.random.uniform(kw, (fan_in, fan_out), jnp.float32, -bound, bound)
        b = jax.random.uniform(kb, (1, fan_out), jnp.float32, -bound, bound)
        return w, b

    w1, b1 = lin(ks[0], ks[1], noise_feature, width)
    w2, b2 = lin(ks[2], ks[3], width, width)
    w3, b3 = lin(ks[4], ks[5], width, width)
    w4, b4 = lin(ks[6], ks[7], width, width)
    w5, b5 = lin(ks[8], ks[9], width, p)
    tcw, tcb = lin(ks[10], ks[11], coord_dim, p)   # trunk_components proxy
    tmw, tmb = lin(ks[12], ks[13], coord_dim, 1)   # trunk_means proxy
    return dict(w1=w1, b1=b1, w2=w2, b2=b2, w3=w3, b3=b3, w4=w4, b4=b4,
                w5=w5, b5=b5, tcw=tcw, tcb=tcb, tmw=tmw, tmb=tmb)


def reference(noise, coords, params):
    """Plain-JAX reference mirroring the PyTorch forward exactly."""
    h = noise
    for i in (1, 2, 3, 4):
        h = jnp.tanh(h @ params[f"w{i}"] + params[f"b{i}"])
    out_b = h @ params["w5"] + params["b5"]                       # [B, P]
    out_t = coords @ params["tcw"] + params["tcb"]                # [N, P]
    out_bias = coords @ params["tmw"] + params["tmb"]             # [N, 1]
    B, N = noise.shape[0], coords.shape[0]
    out_b_r = jnp.repeat(out_b, N, axis=0)                        # repeat_interleave
    out_t_r = jnp.tile(out_t, (B, 1))
    out_bias_r = jnp.squeeze(jnp.tile(out_bias, (B, 1)))
    return jnp.sum(out_b_r * out_t_r, axis=1) + out_bias_r


if __name__ == "__main__":
    key = jax.random.PRNGKey(0)
    k_noise, k_coord, k_param = jax.random.split(key, 3)

    B, F = 2, 8          # batch of noise samples, sensor count (noise_feature)
    P = 16               # POD modes p
    N, D = 16, 2         # number of coordinates, coordinate dim
    WIDTH = 32

    noise = jax.random.normal(k_noise, (B, F), jnp.float32)
    coords = jax.random.uniform(k_coord, (N, D), jnp.float32)
    params = init_params(k_param, F, P, D, WIDTH)

    apply_fn = make_pod_deeponet(params)           # slab packed once here
    pred = apply_fn(noise, coords)
    pred = jax.block_until_ready(pred)

    ref = reference(noise, coords, params)
    assert pred.shape == (B * N,)
    assert jnp.allclose(pred, ref, atol=1e-5, rtol=1e-5), (
        f"max err {jnp.max(jnp.abs(pred - ref))}")

    print("KERNEL_OK")
</pallas_src>

<mosaic_0001>
module attributes {stable_mosaic.version = 11 : i64} {
  func.func @pod_deeponet_kernel(%arg0: i32, %arg1: memref<8x8xf32, #tpu.memory_space<vmem>>, %arg2: memref<3x128xf32, #tpu.memory_space<vmem>>, %arg3: memref<200x128xf32, #tpu.memory_space<vmem>>, %arg4: memref<8x128xf32, #tpu.memory_space<vmem>>) attributes {dimension_semantics = [#tpu.dimension_semantics<parallel>], iteration_bounds = array<i64: 1>, scalar_prefetch = 0 : i64, scratch_operands = 0 : i64, tpu.core_type = #tpu.core_type<tc>, window_params = [{pipeline_mode = #tpu.pipeline_mode<synchronous>, transform_indices = @transform_0, window_bounds = array<i64: 8, 8>}, {transform_indices = @transform_1, window_bounds = array<i64: 3, 128>}, {pipeline_mode = #tpu.pipeline_mode<synchronous>, transform_indices = @transform_2, window_bounds = array<i64: 200, 128>}, {transform_indices = @transform_3, window_bounds = array<i64: 8, 128>}]} {
    %c0 = arith.constant 0 : index
    %c0_0 = arith.constant 0 : index
    %0 = vector.load %arg1[%c0, %c0_0] : memref<8x8xf32, #tpu.memory_space<vmem>>, vector<8x8xf32>
    %c0_1 = arith.constant 0 : index
    %c0_2 = arith.constant 0 : index
    %1 = vector.load %arg3[%c0_1, %c0_2] : memref<200x128xf32, #tpu.memory_space<vmem>>, vector<8x32xf32>
    %c8 = arith.constant 8 : index
    %c0_3 = arith.constant 0 : index
    %2 = vector.load %arg3[%c8, %c0_3] : memref<200x128xf32, #tpu.memory_space<vmem>>, vector<1x32xf32>
    %cst = arith.constant dense<0.000000e+00> : vector<8x32xf32>
    %3 = tpu.matmul %0, %1, %cst {dimension_numbers = #tpu.dot_dimension_numbers<[1], [0], [0], [1], [0, 0, 1, 1], [], []>} : vector<8x8xf32>, vector<8x32xf32>, vector<8x32xf32> -> vector<8x32xf32>
    %4 = vector.broadcast %2 : vector<1x32xf32> to vector<8x32xf32>
    %5 = arith.addf %3, %4 : vector<8x32xf32>
    %6 = math.tanh %5 : vector<8x32xf32>
    %c16 = arith.constant 16 : index
    %c0_4 = arith.constant 0 : index
    %7 = vector.load %arg3[%c16, %c0_4] : memref<200x128xf32, #tpu.memory_space<vmem>>, vector<32x32xf32>
    %c48 = arith.constant 48 : index
    %c0_5 = arith.constant 0 : index
    %8 = vector.load %arg3[%c48, %c0_5] : memref<200x128xf32, #tpu.memory_space<vmem>>, vector<1x32xf32>
    %cst_6 = arith.constant dense<0.000000e+00> : vector<8x32xf32>
    %9 = tpu.matmul %6, %7, %cst_6 {dimension_numbers = #tpu.dot_dimension_numbers<[1], [0], [0], [1], [0, 0, 1, 1], [], []>} : vector<8x32xf32>, vector<32x32xf32>, vector<8x32xf32> -> vector<8x32xf32>
    %10 = vector.broadcast %8 : vector<1x32xf32> to vector<8x32xf32>
    %11 = arith.addf %9, %10 : vector<8x32xf32>
    %12 = math.tanh %11 : vector<8x32xf32>
    %c56 = arith.constant 56 : index
    %c0_7 = arith.constant 0 : index
    %13 = vector.load %arg3[%c56, %c0_7] : memref<200x128xf32, #tpu.memory_space<vmem>>, vector<32x32xf32>
    %c88 = arith.constant 88 : index
    %c0_8 = arith.constant 0 : index
    %14 = vector.load %arg3[%c88, %c0_8] : memref<200x128xf32, #tpu.memory_space<vmem>>, vector<1x32xf32>
    %cst_9 = arith.constant dense<0.000000e+00> : vector<8x32xf32>
    %15 = tpu.matmul %12, %13, %cst_9 {dimension_numbers = #tpu.dot_dimension_numbers<[1], [0], [0], [1], [0, 0, 1, 1], [], []>} : vector<8x32xf32>, vector<32x32xf32>, vector<8x32xf32> -> vector<8x32xf32>
    %16 = vector.broadcast %14 : vector<1x32xf32> to vector<8x32xf32>
    %17 = arith.addf %15, %16 : vector<8x32xf32>
    %18 = math.tanh %17 : vector<8x32xf32>
    %c96 = arith.constant 96 : index
    %c0_10 = arith.constant 0 : index
    %19 = vector.load %arg3[%c96, %c0_10] : memref<200x128xf32, #tpu.memory_space<vmem>>, vector<32x32xf32>
    %c128 = arith.constant 128 : index
    %c0_11 = arith.constant 0 : index
    %20 = vector.load %arg3[%c128, %c0_11] : memref<200x128xf32, #tpu.memory_space<vmem>>, vector<1x32xf32>
    %cst_12 = arith.constant dense<0.000000e+00> : vector<8x32xf32>
    %21 = tpu.matmul %18, %19, %cst_12 {dimension_numbers = #tpu.dot_dimension_numbers<[1], [0], [0], [1], [0, 0, 1, 1], [], []>} : vector<8x32xf32>, vector<32x32xf32>, vector<8x32xf32> -> vector<8x32xf32>
    %22 = vector.broadcast %20 : vector<1x32xf32> to vector<8x32xf32>
    %23 = arith.addf %21, %22 : vector<8x32xf32>
    %24 = math.tanh %23 : vector<8x32xf32>
    %c136 = arith.constant 136 : index
    %c0_13 = arith.constant 0 : index
    %25 = vector.load %arg3[%c136, %c0_13] : memref<200x128xf32, #tpu.memory_space<vmem>>, vector<32x17xf32>
    %c168 = arith.constant 168 : index
    %c0_14 = arith.constant 0 : index
    %26 = vector.load %arg3[%c168, %c0_14] : memref<200x128xf32, #tpu.memory_space<vmem>>, vector<1x17xf32>
    %cst_15 = arith.constant dense<0.000000e+00> : vector<8x17xf32>
    %27 = tpu.matmul %24, %25, %cst_15 {dimension_numbers = #tpu.dot_dimension_numbers<[1], [0], [0], [1], [0, 0, 1, 1], [], []>} : vector<8x32xf32>, vector<32x17xf32>, vector<8x17xf32> -> vector<8x17xf32>
    %28 = vector.broadcast %26 : vector<1x17xf32> to vector<8x17xf32>
    %29 = arith.addf %27, %28 : vector<8x17xf32>
    %c176 = arith.constant 176 : index
    %c0_16 = arith.constant 0 : index
    %30 = vector.load %arg3[%c176, %c0_16] : memref<200x128xf32, #tpu.memory_space<vmem>>, vector<17x3xf32>
    %c0_17 = arith.constant 0 : index
    %c0_18 = arith.constant 0 : index
    %31 = vector.load %arg2[%c0_17, %c0_18] : memref<3x128xf32, #tpu.memory_space<vmem>>, vector<3x128xf32>
    %cst_19 = arith.constant dense<0.000000e+00> : vector<17x128xf32>
    %32 = tpu.matmul %30, %31, %cst_19 {dimension_numbers = #tpu.dot_dimension_numbers<[1], [0], [0], [1], [0, 0, 1, 1], [], []>} : vector<17x3xf32>, vector<3x128xf32>, vector<17x128xf32> -> vector<17x128xf32>
    %cst_20 = arith.constant dense<0.000000e+00> : vector<8x128xf32>
    %33 = tpu.matmul %29, %32, %cst_20 {dimension_numbers = #tpu.dot_dimension_numbers<[1], [0], [0], [1], [0, 0, 1, 1], [], []>} : vector<8x17xf32>, vector<17x128xf32>, vector<8x128xf32> -> vector<8x128xf32>
    %c0_21 = arith.constant 0 : index
    %c0_22 = arith.constant 0 : index
    %34 = vector.load %arg4[%c0_21, %c0_22] : memref<8x128xf32, #tpu.memory_space<vmem>>, vector<8x128xf32>
    tpu.vector_store %arg4[%c0_21, %c0_22], %33 {strides = array<i32>} : memref<8x128xf32, #tpu.memory_space<vmem>>, vector<8x128xf32>,
    return
  }
  func.func @transform_0(%arg0: i32) -> (i32, i32) {
    %c0_i32 = arith.constant 0 : i32
    %c0_i32_0 = arith.constant 0 : i32
    %c0_i32_1 = arith.constant 0 : i32
    return %c0_i32, %c0_i32_0 : i32, i32
  }
  func.func @transform_1(%arg0: i32) -> (i32, i32) {
    %c0_i32 = arith.constant 0 : i32
    %c0_i32_0 = arith.constant 0 : i32
    return %c0_i32, %arg0 : i32, i32
  }
  func.func @transform_2(%arg0: i32) -> (i32, i32) {
    %c0_i32 = arith.constant 0 : i32
    %c0_i32_0 = arith.constant 0 : i32
    %c0_i32_1 = arith.constant 0 : i32
    return %c0_i32, %c0_i32_0 : i32, i32
  }
  func.func @transform_3(%arg0: i32) -> (i32, i32) {
    %c0_i32 = arith.constant 0 : i32
    %c0_i32_0 = arith.constant 0 : i32
    return %c0_i32, %arg0 : i32, i32
  }
}

</mosaic_0001>

<llo_original>
// kernel: _forward.1
$region0: #{_forward.1}
  #allocation0 [shape = 'u32[]', space=smem, size = 0x4, offset = 0x4, fixed_abs, tag = 'smem constant byte address 0x4 - core index']
  #allocation1 [shape = 'u32[144,128]{1,0:T(1,128)}', space=vmem, size = 0x12000, scoped, tag = 'internal scratch']
  %s0 = inlined_call_operand.vmem [shape: f32[8,8], index: 0, kind: input, shape index: {}]
  %s1 = inlined_call_operand.vmem [shape: f32[3,128], index: 1, kind: input, shape index: {}]
  %s2 = inlined_call_operand.hbm [shape: f32[200,128], index: 2, kind: input, shape index: {}]
  %s3 = inlined_call_operand.vmem [shape: f32[8,128], index: 3, kind: output, shape index: {}]
  %s4 = sld [smem:[#allocation0]]
  $region26: #{_forward.1} parent=0
    _
  %s6 = ssub.s32 1, %s4
  %s7 = scalar_select 0, %s6, %s4
  $region1: #{_forward.1} parent=0
    #allocation2 [shape = 'u8[102400]{0}', space=vmem, size = 0x19000, scoped, tag = 'input window, operand 2, single buffered']
    #allocation3 [shape = 's32[1]{0}', space=sflag, size = 0x4, scoped, tag = 'scoped memory for _forward.1']
    %8 = vsyncpa [#allocation3], 0
    // Predicated region
    $region2: #{_forward.1} parent=1 // pred_check
      _
    $region3: #{_forward.1} parent=1 // pred_check_branch
      %10 = sbr.rel (0) target = $region5
    $region4: #{_forward.1} parent=1 // pred_region
      _
    $region5: #{_forward.1} parent=1 // pred_fallthru
      _
    // Predicated region
    $region6: #{_forward.1} parent=1 // pred_check
      _
    $region7: #{_forward.1} parent=1 // pred_check_branch
      %12 = sbr.rel (0) target = $region9
    $region8: #{_forward.1} parent=1 // pred_region
      _
    $region9: #{_forward.1} parent=1 // pred_fallthru
      _
    // Predicated region
    $region10: #{_forward.1} parent=1 // pred_check
      _
    $region11: #{_forward.1} parent=1 // pred_check_branch
      %14 = sbr.rel (0) target = $region13
    $region12: #{_forward.1} parent=1 // pred_region
      %s16 = ssub.s32 3200, 3200
      %17 = vsyncadd [#allocation3], %s16
      %s18 = sshll.u32 [#allocation2], 4
      %s19 = int_to_ptr.vmem [resolvable:$true] %s18
      %24 = dma.hbm_to_vmem [thread:$0]  %s2, 3200, %s19, [#allocation3], 128, 128, 8
    $region13: #{_forward.1} parent=1 // pred_fallthru
      _
    // Predicated region
    $region14: #{_forward.1} parent=1 // pred_check
      _
    $region15: #{_forward.1} parent=1 // pred_check_branch
      %26 = sbr.rel (0) target = $region17
    $region16: #{_forward.1} parent=1 // pred_region
      %27 = dma.done [#allocation3], 3200
    $region17: #{_forward.1} parent=1 // pred_fallthru
      _
    %v28 = vld [vmem:[%s0] sm:$0xff]
    %v29 = vld [vmem:[#allocation2] sm:$0xff]
    %v30 = vld [vmem:[#allocation2 + $0x8] sm:$0x1]
    %v31 = vlaneseq
    %v32 = vshrl.u32 %v31, 7
    %v33 = vsub.s32 0, %v32
    %v34 = vrot.slane %v30, %v33
    %vm35 = vcmask 64512
    %v37 = vsel %vm35, %v28, 0
    %39 = vmatprep.subr.mxu0 0.0
    %40 = vmatpush1.msra.mxu0 0.0
    %41 = vmatprep.subr.mxu0 0.0
    %42 = vmatpush1.msra.mxu0 0.0
    %43 = vmatprep.subr.mxu0 0.0
    %44 = vmatpush1.msra.mxu0 0.0
    %45 = vmatprep.subr.mxu0 0.0
    %46 = vmatpush1.msra.mxu0 0.0
    %47 = vmatprep.subr.mxu0 0.0
    %48 = vmatpush1.msra.mxu0 0.0
    %49 = vmatprep.subr.mxu0 0.0
    %50 = vmatpush1.msra.mxu0 0.0
    %51 = vmatprep.subr.mxu0 0.0
    %52 = vmatpush1.msra.mxu0 0.0
    %53 = vmatprep.subr.mxu0 0.0
    %54 = vmatpush1.msra.mxu0 0.0
    %55 = vmatprep.subr.mxu0 0.0
    %56 = vmatpush1.msra.mxu0 0.0
    %57 = vmatprep.subr.mxu0 0.0
    %58 = vmatpush1.msra.mxu0 0.0
    %59 = vmatprep.subr.mxu0 0.0
    %60 = vmatpush1.msra.mxu0 0.0
    %61 = vmatprep.subr.mxu0 0.0
    %62 = vmatpush1.msra.mxu0 0.0
    %63 = vmatprep.subr.mxu0 0.0
    %64 = vmatpush1.msra.mxu0 0.0
    %65 = vmatprep.subr.mxu0 0.0
    %66 = vmatpush1.msra.mxu0 0.0
    %67 = vmatprep.subr.mxu0 0.0
    %68 = vmatpush1.msra.mxu0 0.0
    %69 = vmatprep.subr.mxu0 0.0
    %70 = vmatpush1.msra.mxu0 %v29
    %71 = vmatprep.subr.mxu0 0.0
    %72 = vmatpush2.msra.mxu0 0.0
    %73 = vmatprep.subr.mxu0 0.0
    %74 = vmatpush2.msra.mxu0 0.0
    %75 = vmatprep.subr.mxu0 0.0
    %76 = vmatpush2.msra.mxu0 0.0
    %77 = vmatprep.subr.mxu0 0.0
    %78 = vmatpush2.msra.mxu0 0.0
    %79 = vmatprep.subr.mxu0 0.0
    %80 = vmatpush2.msra.mxu0 0.0
    %81 = vmatprep.subr.mxu0 0.0
    %82 = vmatpush2.msra.mxu0 0.0
    %83 = vmatprep.subr.mxu0 0.0
    %84 = vmatpush2.msra.mxu0 0.0
    %85 = vmatprep.subr.mxu0 0.0
    %86 = vmatpush2.msra.mxu0 0.0
    %87 = vmatprep.subr.mxu0 0.0
    %88 = vmatpush2.msra.mxu0 0.0
    %89 = vmatprep.subr.mxu0 0.0
    %90 = vmatpush2.msra.mxu0 0.0
    %91 = vmatprep.subr.mxu0 0.0
    %92 = vmatpush2.msra.mxu0 0.0
    %93 = vmatprep.subr.mxu0 0.0
    %94 = vmatpush2.msra.mxu0 0.0
    %95 = vmatprep.subr.mxu0 0.0
    %96 = vmatpush2.msra.mxu0 0.0
    %97 = vmatprep.subr.mxu0 0.0
    %98 = vmatpush2.msra.mxu0 0.0
    %99 = vmatprep.subr.mxu0 0.0
    %100 = vmatpush2.msra.mxu0 0.0
    %101 = vmatprep.subr.mxu0 0.0
    %102 = vmatpush2.msra.mxu0 0.0
    %103 = vmatprep.mubr.f32.mxu0 0.0
    %104 = vmatmul.mubr.f32.gmra.mxu0 %v37
    %v105 = vpop.f32.mrf.mxu0
    %v106 = vadd.f32 %v34, %v105
    %v107 = vpop.f32.mrf.mxu0
    %108 = vdwg.mxu0
    %v109 = vtanh.pop %v106
    %v110 = vld [vmem:[#allocation2 + $0x10] sm:$0xff]
    %v111 = vld [vmem:[#allocation2 + $0x18] sm:$0xff]
    %v112 = vld [vmem:[#allocation2 + $0x20] sm:$0xff]
    %v113 = vld [vmem:[#allocation2 + $0x28] sm:$0xff]
    %v114 = vld [vmem:[#allocation2 + $0x30] sm:$0x1]
    %v115 = vlaneseq
    %v116 = vshrl.u32 %v115, 7
    %v117 = vsub.s32 0, %v116
    %v118 = vrot.slane %v114, %v117
    %vm119 = vcmask 261120
    %v121 = vsel %vm119, %v109, 0
    %123 = vmatprep.subr.mxu0 0.0
    %124 = vmatpush1.msra.mxu0 0.0
    %125 = vmatprep.subr.mxu0 0.0
    %126 = vmatpush1.msra.mxu0 0.0
    %127 = vmatprep.subr.mxu0 0.0
    %128 = vmatpush1.msra.mxu0 0.0
    %129 = vmatprep.subr.mxu0 0.0
    %130 = vmatpush1.msra.mxu0 0.0
    %131 = vmatprep.subr.mxu0 0.0
    %132 = vmatpush1.msra.mxu0 0.0
    %133 = vmatprep.subr.mxu0 0.0
    %134 = vmatpush1.msra.mxu0 0.0
    %135 = vmatprep.subr.mxu0 0.0
    %136 = vmatpush1.msra.mxu0 0.0
    %137 = vmatprep.subr.mxu0 0.0
    %138 = vmatpush1.msra.mxu0 0.0
    %139 = vmatprep.subr.mxu0 0.0
    %140 = vmatpush1.msra.mxu0 0.0
    %141 = vmatprep.subr.mxu0 0.0
    %142 = vmatpush1.msra.mxu0 0.0
    %143 = vmatprep.subr.mxu0 0.0
    %144 = vmatpush1.msra.mxu0 0.0
    %145 = vmatprep.subr.mxu0 0.0
    %146 = vmatpush1.msra.mxu0 0.0
    %147 = vmatprep.subr.mxu0 0.0
    %148 = vmatpush1.msra.mxu0 %v113
    %149 = vmatprep.subr.mxu0 0.0
    %150 = vmatpush1.msra.mxu0 %v112
    %151 = vmatprep.subr.mxu0 0.0
    %152 = vmatpush1.msra.mxu0 %v111
    %153 = vmatprep.subr.mxu0 0.0
    %154 = vmatpush1.msra.mxu0 %v110
    %155 = vmatprep.subr.mxu0 0.0
    %156 = vmatpush2.msra.mxu0 0.0
    %157 = vmatprep.subr.mxu0 0.0
    %158 = vmatpush2.msra.mxu0 0.0
    %159 = vmatprep.subr.mxu0 0.0
    %160 = vmatpush2.msra.mxu0 0.0
    %161 = vmatprep.subr.mxu0 0.0
    %162 = vmatpush2.msra.mxu0 0.0
    %163 = vmatprep.subr.mxu0 0.0
    %164 = vmatpush2.msra.mxu0 0.0
    %165 = vmatprep.subr.mxu0 0.0
    %166 = vmatpush2.msra.mxu0 0.0
    %167 = vmatprep.subr.mxu0 0.0
    %168 = vmatpush2.msra.mxu0 0.0
    %169 = vmatprep.subr.mxu0 0.0
    %170 = vmatpush2.msra.mxu0 0.0
    %171 = vmatprep.subr.mxu0 0.0
    %172 = vmatpush2.msra.mxu0 0.0
    %173 = vmatprep.subr.mxu0 0.0
    %174 = vmatpush2.msra.mxu0 0.0
    %175 = vmatprep.subr.mxu0 0.0
    %176 = vmatpush2.msra.mxu0 0.0
    %177 = vmatprep.subr.mxu0 0.0
    %178 = vmatpush2.msra.mxu0 0.0
    %179 = vmatprep.subr.mxu0 0.0
    %180 = vmatpush2.msra.mxu0 0.0
    %181 = vmatprep.subr.mxu0 0.0
    %182 = vmatpush2.msra.mxu0 0.0
    %183 = vmatprep.subr.mxu0 0.0
    %184 = vmatpush2.msra.mxu0 0.0
    %185 = vmatprep.subr.mxu0 0.0
    %186 = vmatpush2.msra.mxu0 0.0
    %187 = vmatprep.mubr.f32.mxu0 0.0
    %188 = vmatmul.mubr.f32.gmra.mxu0 %v121
    %v189 = vpop.f32.mrf.mxu0
    %v190 = vadd.f32 %v118, %v189
    %v191 = vpop.f32.mrf.mxu0
    %192 = vdwg.mxu0
    %v193 = vtanh.pop %v190
    %v194 = vld [vmem:[#allocation2 + $0x38] sm:$0xff]
    %v195 = vld [vmem:[#allocation2 + $0x40] sm:$0xff]
    %v196 = vld [vmem:[#allocation2 + $0x48] sm:$0xff]
    %v197 = vld [vmem:[#allocation2 + $0x50] sm:$0xff]
    %v198 = vld [vmem:[#allocation2 + $0x58] sm:$0x1]
    %v199 = vlaneseq
    %v200 = vshrl.u32 %v199, 7
    %v201 = vsub.s32 0, %v200
    %v202 = vrot.slane %v198, %v201
    %v204 = vsel %vm119, %v193, 0
    %206 = vmatprep.subr.mxu0 0.0
    %207 = vmatpush1.msra.mxu0 0.0
    %208 = vmatprep.subr.mxu0 0.0
    %209 = vmatpush1.msra.mxu0 0.0
    %210 = vmatprep.subr.mxu0 0.0
    %211 = vmatpush1.msra.mxu0 0.0
    %212 = vmatprep.subr.mxu0 0.0
    %213 = vmatpush1.msra.mxu0 0.0
    %214 = vmatprep.subr.mxu0 0.0
    %215 = vmatpush1.msra.mxu0 0.0
    %216 = vmatprep.subr.mxu0 0.0
    %217 = vmatpush1.msra.mxu0 0.0
    %218 = vmatprep.subr.mxu0 0.0
    %219 = vmatpush1.msra.mxu0 0.0
    %220 = vmatprep.subr.mxu0 0.0
    %221 = vmatpush1.msra.mxu0 0.0
    %222 = vmatprep.subr.mxu0 0.0
    %223 = vmatpush1.msra.mxu0 0.0
    %224 = vmatprep.subr.mxu0 0.0
    %225 = vmatpush1.msra.mxu0 0.0
    %226 = vmatprep.subr.mxu0 0.0
    %227 = vmatpush1.msra.mxu0 0.0
    %228 = vmatprep.subr.mxu0 0.0
    %229 = vmatpush1.msra.mxu0 0.0
    %230 = vmatprep.subr.mxu0 0.0
    %231 = vmatpush1.msra.mxu0 %v197
    %232 = vmatprep.subr.mxu0 0.0
    %233 = vmatpush1.msra.mxu0 %v196
    %234 = vmatprep.subr.mxu0 0.0
    %235 = vmatpush1.msra.mxu0 %v195
    %236 = vmatprep.subr.mxu0 0.0
    %237 = vmatpush1.msra.mxu0 %v194
    %238 = vmatprep.subr.mxu0 0.0
    %239 = vmatpush2.msra.mxu0 0.0
    %240 = vmatprep.subr.mxu0 0.0
    %241 = vmatpush2.msra.mxu0 0.0
    %242 = vmatprep.subr.mxu0 0.0
    %243 = vmatpush2.msra.mxu0 0.0
    %244 = vmatprep.subr.mxu0 0.0
    %245 = vmatpush2.msra.mxu0 0.0
    %246 = vmatprep.subr.mxu0 0.0
    %247 = vmatpush2.msra.mxu0 0.0
    %248 = vmatprep.subr.mxu0 0.0
    %249 = vmatpush2.msra.mxu0 0.0
    %250 = vmatprep.subr.mxu0 0.0
    %251 = vmatpush2.msra.mxu0 0.0
    %252 = vmatprep.subr.mxu0 0.0
    %253 = vmatpush2.msra.mxu0 0.0
    %254 = vmatprep.subr.mxu0 0.0
    %255 = vmatpush2.msra.mxu0 0.0
    %256 = vmatprep.subr.mxu0 0.0
    %257 = vmatpush2.msra.mxu0 0.0
    %258 = vmatprep.subr.mxu0 0.0
    %259 = vmatpush2.msra.mxu0 0.0
    %260 = vmatprep.subr.mxu0 0.0
    %261 = vmatpush2.msra.mxu0 0.0
    %262 = vmatprep.subr.mxu0 0.0
    %263 = vmatpush2.msra.mxu0 0.0
    %264 = vmatprep.subr.mxu0 0.0
    %265 = vmatpush2.msra.mxu0 0.0
    %266 = vmatprep.subr.mxu0 0.0
    %267 = vmatpush2.msra.mxu0 0.0
    %268 = vmatprep.subr.mxu0 0.0
    %269 = vmatpush2.msra.mxu0 0.0
    %270 = vmatprep.mubr.f32.mxu0 0.0
    %271 = vmatmul.mubr.f32.gmra.mxu0 %v204
    %v272 = vpop.f32.mrf.mxu0
    %v273 = vadd.f32 %v202, %v272
    %v274 = vpop.f32.mrf.mxu0
    %275 = vdwg.mxu0
    %v276 = vtanh.pop %v273
    %v277 = vld [vmem:[#allocation2 + $0x60] sm:$0xff]
    %v278 = vld [vmem:[#allocation2 + $0x68] sm:$0xff]
    %v279 = vld [vmem:[#allocation2 + $0x70] sm:$0xff]
    %v280 = vld [vmem:[#allocation2 + $0x78] sm:$0xff]
    %v281 = vld [vmem:[#allocation2 + $0x80] sm:$0x1]
    %v282 = vlaneseq
    %v283 = vshrl.u32 %v282, 7
    %v284 = vsub.s32 0, %v283
    %v285 = vrot.slane %v281, %v284
    %v287 = vsel %vm119, %v276, 0
    %289 = vmatprep.subr.mxu0 0.0
    %290 = vmatpush1.msra.mxu0 0.0
    %291 = vmatprep.subr.mxu0 0.0
    %292 = vmatpush1.msra.mxu0 0.0
    %293 = vmatprep.subr.mxu0 0.0
    %294 = vmatpush1.msra.mxu0 0.0
    %295 = vmatprep.subr.mxu0 0.0
    %296 = vmatpush1.msra.mxu0 0.0
    %297 = vmatprep.subr.mxu0 0.0
    %298 = vmatpush1.msra.mxu0 0.0
    %299 = vmatprep.subr.mxu0 0.0
    %300 = vmatpush1.msra.mxu0 0.0
    %301 = vmatprep.subr.mxu0 0.0
    %302 = vmatpush1.msra.mxu0 0.0
    %303 = vmatprep.subr.mxu0 0.0
    %304 = vmatpush1.msra.mxu0 0.0
    %305 = vmatprep.subr.mxu0 0.0
    %306 = vmatpush1.msra.mxu0 0.0
    %307 = vmatprep.subr.mxu0 0.0
    %308 = vmatpush1.msra.mxu0 0.0
    %309 = vmatprep.subr.mxu0 0.0
    %310 = vmatpush1.msra.mxu0 0.0
    %311 = vmatprep.subr.mxu0 0.0
    %312 = vmatpush1.msra.mxu0 0.0
    %313 = vmatprep.subr.mxu0 0.0
    %314 = vmatpush1.msra.mxu0 %v280
    %315 = vmatprep.subr.mxu0 0.0
    %316 = vmatpush1.msra.mxu0 %v279
    %317 = vmatprep.subr.mxu0 0.0
    %318 = vmatpush1.msra.mxu0 %v278
    %319 = vmatprep.subr.mxu0 0.0
    %320 = vmatpush1.msra.mxu0 %v277
    %321 = vmatprep.subr.mxu0 0.0
    %322 = vmatpush2.msra.mxu0 0.0
    %323 = vmatprep.subr.mxu0 0.0
    %324 = vmatpush2.msra.mxu0 0.0
    %325 = vmatprep.subr.mxu0 0.0
    %326 = vmatpush2.msra.mxu0 0.0
    %327 = vmatprep.subr.mxu0 0.0
    %328 = vmatpush2.msra.mxu0 0.0
    %329 = vmatprep.subr.mxu0 0.0
    %330 = vmatpush2.msra.mxu0 0.0
    %331 = vmatprep.subr.mxu0 0.0
    %332 = vmatpush2.msra.mxu0 0.0
    %333 = vmatprep.subr.mxu0 0.0
    %334 = vmatpush2.msra.mxu0 0.0
    %335 = vmatprep.subr.mxu0 0.0
    %336 = vmatpush2.msra.mxu0 0.0
    %337 = vmatprep.subr.mxu0 0.0
    %338 = vmatpush2.msra.mxu0 0.0
    %339 = vmatprep.subr.mxu0 0.0
    %340 = vmatpush2.msra.mxu0 0.0
    %341 = vmatprep.subr.mxu0 0.0
    %342 = vmatpush2.msra.mxu0 0.0
    %343 = vmatprep.subr.mxu0 0.0
    %344 = vmatpush2.msra.mxu0 0.0
    %345 = vmatprep.subr.mxu0 0.0
    %346 = vmatpush2.msra.mxu0 0.0
    %347 = vmatprep.subr.mxu0 0.0
    %348 = vmatpush2.msra.mxu0 0.0
    %349 = vmatprep.subr.mxu0 0.0
    %350 = vmatpush2.msra.mxu0 0.0
    %351 = vmatprep.subr.mxu0 0.0
    %352 = vmatpush2.msra.mxu0 0.0
    %353 = vmatprep.mubr.f32.mxu0 0.0
    %354 = vmatmul.mubr.f32.gmra.mxu0 %v287
    %v355 = vpop.f32.mrf.mxu0
    %v356 = vadd.f32 %v285, %v355
    %v357 = vpop.f32.mrf.mxu0
    %358 = vdwg.mxu0
    %v359 = vtanh.pop %v356
    %v360 = vld [vmem:[#allocation2 + $0x88] sm:$0xff]
    %v361 = vld [vmem:[#allocation2 + $0x90] sm:$0xff]
    %v362 = vld [vmem:[#allocation2 + $0x98] sm:$0xff]
    %v363 = vld [vmem:[#allocation2 + $0xa0] sm:$0xff]
    %v364 = vld [vmem:[#allocation2 + $0xa8] sm:$0x1]
    %v365 = vlaneseq
    %v366 = vshrl.u32 %v365, 7
    %v367 = vsub.s32 0, %v366
    %v368 = vrot.slane %v364, %v367
    %v370 = vsel %vm119, %v359, 0
    %372 = vmatprep.subr.mxu0 0.0
    %373 = vmatpush1.msra.mxu0 0.0
    %374 = vmatprep.subr.mxu0 0.0
    %375 = vmatpush1.msra.mxu0 0.0
    %376 = vmatprep.subr.mxu0 0.0
    %377 = vmatpush1.msra.mxu0 0.0
    %378 = vmatprep.subr.mxu0 0.0
    %379 = vmatpush1.msra.mxu0 0.0
    %380 = vmatprep.subr.mxu0 0.0
    %381 = vmatpush1.msra.mxu0 0.0
    %382 = vmatprep.subr.mxu0 0.0
    %383 = vmatpush1.msra.mxu0 0.0
    %384 = vmatprep.subr.mxu0 0.0
    %385 = vmatpush1.msra.mxu0 0.0
    %386 = vmatprep.subr.mxu0 0.0
    %387 = vmatpush1.msra.mxu0 0.0
    %388 = vmatprep.subr.mxu0 0.0
    %389 = vmatpush1.msra.mxu0 0.0
    %390 = vmatprep.subr.mxu0 0.0
    %391 = vmatpush1.msra.mxu0 0.0
    %392 = vmatprep.subr.mxu0 0.0
    %393 = vmatpush1.msra.mxu0 0.0
    %394 = vmatprep.subr.mxu0 0.0
    %395 = vmatpush1.msra.mxu0 0.0
    %396 = vmatprep.subr.mxu0 0.0
    %397 = vmatpush1.msra.mxu0 %v363
    %398 = vmatprep.subr.mxu0 0.0
    %399 = vmatpush1.msra.mxu0 %v362
    %400 = vmatprep.subr.mxu0 0.0
    %401 = vmatpush1.msra.mxu0 %v361
    %402 = vmatprep.subr.mxu0 0.0
    %403 = vmatpush1.msra.mxu0 %v360
    %404 = vmatprep.subr.mxu0 0.0
    %405 = vmatpush2.msra.mxu0 0.0
    %406 = vmatprep.subr.mxu0 0.0
    %407 = vmatpush2.msra.mxu0 0.0
    %408 = vmatprep.subr.mxu0 0.0
    %409 = vmatpush2.msra.mxu0 0.0
    %410 = vmatprep.subr.mxu0 0.0
    %411 = vmatpush2.msra.mxu0 0.0
    %412 = vmatprep.subr.mxu0 0.0
    %413 = vmatpush2.msra.mxu0 0.0
    %414 = vmatprep.subr.mxu0 0.0
    %415 = vmatpush2.msra.mxu0 0.0
    %416 = vmatprep.subr.mxu0 0.0
    %417 = vmatpush2.msra.mxu0 0.0
    %418 = vmatprep.subr.mxu0 0.0
    %419 = vmatpush2.msra.mxu0 0.0
    %420 = vmatprep.subr.mxu0 0.0
    %421 = vmatpush2.msra.mxu0 0.0
    %422 = vmatprep.subr.mxu0 0.0
    %423 = vmatpush2.msra.mxu0 0.0
    %424 = vmatprep.subr.mxu0 0.0
    %425 = vmatpush2.msra.mxu0 0.0
    %426 = vmatprep.subr.mxu0 0.0
    %427 = vmatpush2.msra.mxu0 0.0
    %428 = vmatprep.subr.mxu0 0.0
    %429 = vmatpush2.msra.mxu0 0.0
    %430 = vmatprep.subr.mxu0 0.0
    %431 = vmatpush2.msra.mxu0 0.0
    %432 = vmatprep.subr.mxu0 0.0
    %433 = vmatpush2.msra.mxu0 0.0
    %434 = vmatprep.subr.mxu0 0.0
    %435 = vmatpush2.msra.mxu0 0.0
    %436 = vmatprep.mubr.f32.mxu0 0.0
    %437 = vmatmul.mubr.f32.gmra.mxu0 %v370
    %v438 = vpop.f32.mrf.mxu0
    %v439 = vadd.f32 %v368, %v438
    %v440 = vpop.f32.mrf.mxu0
    %441 = vdwg.mxu0
    %v442 = vld [vmem:[#allocation2 + $0xb0] sm:$0xff]
    %v443 = vld [vmem:[#allocation2 + $0xb8] sm:$0xff]
    %v444 = vld [vmem:[#allocation2 + $0xc0] sm:$0x1]
    %v445 = vld [vmem:[%s1] sm:$0x7]
    %vm446 = vcmask 23552
    %v448 = vsel %vm446, %v442, 0
    %v451 = vsel %vm446, %v443, 0
    %v454 = vsel %vm446, %v444, 0
    %vm456 = vcmask 1042432
    %v458 = vsel %vm456, %v445, 0
    %460 = vmatprep.subr.mxu0 0.0
    %461 = vmatpush1.msra.mxu0 0.0
    %462 = vmatprep.subr.mxu0 0.0
    %463 = vmatpush1.msra.mxu0 0.0
    %464 = vmatprep.subr.mxu0 0.0
    %465 = vmatpush1.msra.mxu0 0.0
    %466 = vmatprep.subr.mxu0 0.0
    %467 = vmatpush1.msra.mxu0 0.0
    %468 = vmatprep.subr.mxu0 0.0
    %469 = vmatpush1.msra.mxu0 0.0
    %470 = vmatprep.subr.mxu0 0.0
    %471 = vmatpush1.msra.mxu0 0.0
    %472 = vmatprep.subr.mxu0 0.0
    %473 = vmatpush1.msra.mxu0 0.0
    %474 = vmatprep.subr.mxu0 0.0
    %475 = vmatpush1.msra.mxu0 0.0
    %476 = vmatprep.subr.mxu0 0.0
    %477 = vmatpush1.msra.mxu0 0.0
    %478 = vmatprep.subr.mxu0 0.0
    %479 = vmatpush1.msra.mxu0 0.0
    %480 = vmatprep.subr.mxu0 0.0
    %481 = vmatpush1.msra.mxu0 0.0
    %482 = vmatprep.subr.mxu0 0.0
    %483 = vmatpush1.msra.mxu0 0.0
    %484 = vmatprep.subr.mxu0 0.0
    %485 = vmatpush1.msra.mxu0 0.0
    %486 = vmatprep.subr.mxu0 0.0
    %487 = vmatpush1.msra.mxu0 0.0
    %488 = vmatprep.subr.mxu0 0.0
    %489 = vmatpush1.msra.mxu0 0.0
    %490 = vmatprep.subr.mxu0 0.0
    %491 = vmatpush1.msra.mxu0 %v458
    %492 = vmatprep.subr.mxu0 0.0
    %493 = vmatpush2.msra.mxu0 0.0
    %494 = vmatprep.subr.mxu0 0.0
    %495 = vmatpush2.msra.mxu0 0.0
    %496 = vmatprep.subr.mxu0 0.0
    %497 = vmatpush2.msra.mxu0 0.0
    %498 = vmatprep.subr.mxu0 0.0
    %499 = vmatpush2.msra.mxu0 0.0
    %500 = vmatprep.subr.mxu0 0.0
    %501 = vmatpush2.msra.mxu0 0.0
    %502 = vmatprep.subr.mxu0 0.0
    %503 = vmatpush2.msra.mxu0 0.0
    %504 = vmatprep.subr.mxu0 0.0
    %505 = vmatpush2.msra.mxu0 0.0
    %506 = vmatprep.subr.mxu0 0.0
    %507 = vmatpush2.msra.mxu0 0.0
    %508 = vmatprep.subr.mxu0 0.0
    %509 = vmatpush2.msra.mxu0 0.0
    %510 = vmatprep.subr.mxu0 0.0
    %511 = vmatpush2.msra.mxu0 0.0
    %512 = vmatprep.subr.mxu0 0.0
    %513 = vmatpush2.msra.mxu0 0.0
    %514 = vmatprep.subr.mxu0 0.0
    %515 = vmatpush2.msra.mxu0 0.0
    %516 = vmatprep.subr.mxu0 0.0
    %517 = vmatpush2.msra.mxu0 0.0
    %518 = vmatprep.subr.mxu0 0.0
    %519 = vmatpush2.msra.mxu0 0.0
    %520 = vmatprep.subr.mxu0 0.0
    %521 = vmatpush2.msra.mxu0 0.0
    %522 = vmatprep.subr.mxu0 0.0
    %523 = vmatpush2.msra.mxu0 0.0
    %524 = vmatprep.mubr.f32.mxu0 0.0
    %525 = vmatmul.mubr.f32.gmra.mxu0 %v448
    %v526 = vpop.f32.mrf.mxu0
    %v527 = vadd.f32 0.0, %v526
    %v528 = vpop.f32.mrf.mxu0
    %529 = vmatprep.mubr.f32.mxu0 0.0
    %530 = vmatmul.mubr.f32.gmra.mxu0 %v451
    %v531 = vpop.f32.mrf.mxu0
    %v532 = vadd.f32 0.0, %v531
    %v533 = vpop.f32.mrf.mxu0
    %534 = vmatprep.mubr.f32.mxu0 0.0
    %535 = vmatmul.mubr.f32.gmra.mxu0 %v454
    %v536 = vpop.f32.mrf.mxu0
    %v537 = vadd.f32 0.0, %v536
    %v538 = vpop.f32.mrf.mxu0
    %539 = vdwg.mxu0
    %vm540 = vcmask 138240
    %v542 = vsel %vm540, %v439, 0
    %vm544 = vcmask 1040384
    %v546 = vsel %vm544, %v537, 0
    %548 = vmatprep.subr.mxu0 0.0
    %549 = vmatpush1.msra.mxu0 0.0
    %550 = vmatprep.subr.mxu0 0.0
    %551 = vmatpush1.msra.mxu0 0.0
    %552 = vmatprep.subr.mxu0 0.0
    %553 = vmatpush1.msra.mxu0 0.0
    %554 = vmatprep.subr.mxu0 0.0
    %555 = vmatpush1.msra.mxu0 0.0
    %556 = vmatprep.subr.mxu0 0.0
    %557 = vmatpush1.msra.mxu0 0.0
    %558 = vmatprep.subr.mxu0 0.0
    %559 = vmatpush1.msra.mxu0 0.0
    %560 = vmatprep.subr.mxu0 0.0
    %561 = vmatpush1.msra.mxu0 0.0
    %562 = vmatprep.subr.mxu0 0.0
    %563 = vmatpush1.msra.mxu0 0.0
    %564 = vmatprep.subr.mxu0 0.0
    %565 = vmatpush1.msra.mxu0 0.0
    %566 = vmatprep.subr.mxu0 0.0
    %567 = vmatpush1.msra.mxu0 0.0
    %568 = vmatprep.subr.mxu0 0.0
    %569 = vmatpush1.msra.mxu0 0.0
    %570 = vmatprep.subr.mxu0 0.0
    %571 = vmatpush1.msra.mxu0 0.0
    %572 = vmatprep.subr.mxu0 0.0
    %573 = vmatpush1.msra.mxu0 0.0
    %574 = vmatprep.subr.mxu0 0.0
    %575 = vmatpush1.msra.mxu0 %v546
    %576 = vmatprep.subr.mxu0 0.0
    %577 = vmatpush1.msra.mxu0 %v532
    %578 = vmatprep.subr.mxu0 0.0
    %579 = vmatpush1.msra.mxu0 %v527
    %580 = vmatprep.subr.mxu0 0.0
    %581 = vmatpush2.msra.mxu0 0.0
    %582 = vmatprep.subr.mxu0 0.0
    %583 = vmatpush2.msra.mxu0 0.0
    %584 = vmatprep.subr.mxu0 0.0
    %585 = vmatpush2.msra.mxu0 0.0
    %586 = vmatprep.subr.mxu0 0.0
    %587 = vmatpush2.msra.mxu0 0.0
    %588 = vmatprep.subr.mxu0 0.0
    %589 = vmatpush2.msra.mxu0 0.0
    %590 = vmatprep.subr.mxu0 0.0
    %591 = vmatpush2.msra.mxu0 0.0
    %592 = vmatprep.subr.mxu0 0.0
    %593 = vmatpush2.msra.mxu0 0.0
    %594 = vmatprep.subr.mxu0 0.0
    %595 = vmatpush2.msra.mxu0 0.0
    %596 = vmatprep.subr.mxu0 0.0
    %597 = vmatpush2.msra.mxu0 0.0
    %598 = vmatprep.subr.mxu0 0.0
    %599 = vmatpush2.msra.mxu0 0.0
    %600 = vmatprep.subr.mxu0 0.0
    %601 = vmatpush2.msra.mxu0 0.0
    %602 = vmatprep.subr.mxu0 0.0
    %603 = vmatpush2.msra.mxu0 0.0
    %604 = vmatprep.subr.mxu0 0.0
    %605 = vmatpush2.msra.mxu0 0.0
    %606 = vmatprep.subr.mxu0 0.0
    %607 = vmatpush2.msra.mxu0 0.0
    %608 = vmatprep.subr.mxu0 0.0
    %609 = vmatpush2.msra.mxu0 0.0
    %610 = vmatprep.subr.mxu0 0.0
    %611 = vmatpush2.msra.mxu0 0.0
    %612 = vmatprep.mubr.f32.mxu0 0.0
    %613 = vmatmul.mubr.f32.gmra.mxu0 %v542
    %v614 = vpop.f32.mrf.mxu0
    %v615 = vadd.f32 0.0, %v614
    %v616 = vpop.f32.mrf.mxu0
    %617 = vdwg.mxu0
    %618 = vst [vmem:[%s3] sm:$0xff] %v615
    // Predicated region
    $region18: #{_forward.1} parent=1 // pred_check
      _
    $region19: #{_forward.1} parent=1 // pred_check_branch
      %620 = sbr.rel (0) target = $region21
    $region20: #{_forward.1} parent=1 // pred_region
      _
    $region21: #{_forward.1} parent=1 // pred_fallthru
      _
    // Predicated region
    $region22: #{_forward.1} parent=1 // pred_check
      _
    $region23: #{_forward.1} parent=1 // pred_check_branch
      %622 = sbr.rel (0) target = $region25
    $region24: #{_forward.1} parent=1 // pred_region
      _
    $region25: #{_forward.1} parent=1 // pred_fallthru
      _
    %623 = vsyncpa [#allocation3], 1

</llo_original>
